<compile_context>
chip_gen: v5e
topology: v5e:2x2
jax: 0.10.0
libtpu: 0.0.40
codegen_flags: <defaults>
</compile_context>

<pallas_src>
import jax
import jax.numpy as jnp
from jax.experimental import pallas as pl
from jax.experimental.pallas import tpu as pltpu


def _round_up(x, m):
    return ((x + m - 1) // m) * m


def _make_gcn_agg_kernel(tk, resident_xw):
    """o[i] = dinv_rows[i] * (sum_k adj_int8[i,k] @ xw_scaled[k]) + b."""

    def kernel(a_ref, xw_ref, dinv_ref, b_ref, o_ref):
        k = pl.program_id(1)

        @pl.when(k == 0)
        def _():
            o_ref[...] = jnp.zeros_like(o_ref)

        # int8 edge counts -> bf16 for the MXU (via f32 for robust lowering;
        # VPU casts are free filler in this HBM-bound loop).
        a = a_ref[...].astype(jnp.float32).astype(jnp.bfloat16)

        if resident_xw:
            # Whole XW lives in VMEM; slice the current k-slab.
            off = pl.multiple_of(k * tk, tk)
            xw = xw_ref[pl.ds(off, tk), :]
        else:
            xw = xw_ref[...]

        # Accumulate directly into the resident f32 output block.
        o_ref[...] += jnp.dot(a, xw, preferred_element_type=jnp.float32)

        @pl.when(k == pl.num_programs(1) - 1)
        def _():
            # Target-side D^{-1/2} scaling in f32 + bias, once, at finalize.
            o_ref[...] = o_ref[...] * dinv_ref[...] + b_ref[...]

    return kernel


def gcn_conv_pallas(x, edge_index, weight, bias):
    """GCNConv forward. x: [N, F_in], edge_index: [2, E] int,
    weight: [F_in, F_out], bias: [F_out]."""
    n, _ = x.shape
    f_out = weight.shape[1]
    src = edge_index[0].astype(jnp.int32)
    dst = edge_index[1].astype(jnp.int32)

    # ---- tiling: large tiles, lane-dense output, even row grid when possible
    f_pad = _round_up(f_out, 128)
    n_pad = _round_up(n, 256)
    tk = min(2048, n_pad)
    n_pad = _round_up(n_pad, tk)
    tm = min(1024, n_pad)
    if n_pad % tm != 0:
        tm = n_pad // 2                 # n_pad is a multiple of 256 -> tm % 128 == 0
    if n_pad // tm < 2 and n_pad >= 512:
        tm = n_pad // 2                 # v7x megacore: give both TCs a row block

    # Keep the whole XW resident in VMEM when small (one HBM read total);
    # budget conservatively so it fits v7x's smaller scoped VMEM even if
    # double-buffered alongside the int8 adjacency tiles.
    xw_vmem_bytes = n_pad * f_pad * 2
    resident_xw = xw_vmem_bytes <= (4 << 20)

    # ---- O(E) degree / normalization (PyG gcn_norm, add_remaining_self_loops)
    ones_e = jnp.ones(src.shape, jnp.float32)
    in_deg = jnp.zeros((n,), jnp.float32).at[dst].add(ones_e)
    self_cnt = jnp.zeros((n,), jnp.float32).at[dst].add(
        jnp.where(src == dst, 1.0, 0.0))
    deg = in_deg + (self_cnt == 0).astype(jnp.float32)   # add only missing self-loops
    dinv = jnp.where(deg > 0, jax.lax.rsqrt(deg), 0.0)   # stays f32

    # ---- raw adjacency as int8 edge counts, built directly at padded shape
    # TODO(synk): int8 overflows for >127 parallel edges between one node pair.
    adj = jnp.zeros((n_pad, n_pad), jnp.int8).at[dst, src].add(
        jnp.ones(src.shape, jnp.int8))
    diag = jnp.arange(n)
    adj = adj.at[diag, diag].max(jnp.ones((n,), jnp.int8))   # don't double existing

    # ---- X @ W once (tiny N x F matmul), source-side D^{-1/2} folded into rows
    xw = jnp.dot(x.astype(jnp.float32), weight.astype(jnp.float32),
                 preferred_element_type=jnp.float32)
    xw_scaled = dinv[:, None] * xw
    xw_p = jnp.zeros((n_pad, f_pad), jnp.bfloat16).at[:n, :f_out].set(
        xw_scaled.astype(jnp.bfloat16))
    dinv_p = jnp.zeros((n_pad, 1), jnp.float32).at[:n, 0].set(dinv)
    bias_p = jnp.zeros((1, f_pad), jnp.float32).at[0, :f_out].set(
        bias.astype(jnp.float32))

    grid = (n_pad // tm, n_pad // tk)

    if resident_xw:
        xw_spec = pl.BlockSpec((n_pad, f_pad), lambda i, k: (0, 0))
        xw_hbm_bytes = n_pad * f_pad * 2
    else:
        xw_spec = pl.BlockSpec((tk, f_pad), lambda i, k: (k, 0))
        xw_hbm_bytes = (n_pad // tm) * n_pad * f_pad * 2   # re-read per row tile

    cost = pl.CostEstimate(
        flops=2 * n_pad * n_pad * f_pad,
        transcendentals=0,
        bytes_accessed=(n_pad * n_pad * 1          # int8 adjacency
                        + xw_hbm_bytes             # XW (resident or streamed)
                        + n_pad * f_pad * 4        # f32 output
                        + n_pad * 4 + f_pad * 4))  # dinv + bias

    out_p = pl.pallas_call(
        _make_gcn_agg_kernel(tk, resident_xw),
        out_shape=jax.ShapeDtypeStruct((n_pad, f_pad), jnp.float32),
        grid_spec=pltpu.PrefetchScalarGridSpec(
            num_scalar_prefetch=0,
            grid=grid,
            in_specs=[
                pl.BlockSpec((tm, tk), lambda i, k: (i, k)),     # int8 adj tile
                xw_spec,                                         # XW (bf16)
                pl.BlockSpec((tm, 1), lambda i, k: (i, 0)),      # dinv rows (f32)
                pl.BlockSpec((1, f_pad), lambda i, k: (0, 0)),   # bias (f32)
            ],
            out_specs=pl.BlockSpec((tm, f_pad), lambda i, k: (i, 0)),
        ),
        compiler_params=pltpu.CompilerParams(
            dimension_semantics=("parallel", "arbitrary")),
        cost_estimate=cost,
    )(adj, xw_p, dinv_p, bias_p)

    return out_p[:n, :f_out]


_gcn_conv_jit = jax.jit(gcn_conv_pallas)


class BaseLayerPallas:
    """Mirrors BaseLayer(hidden_dim): a single GCNConv(hidden_dim, hidden_dim)."""

    def __init__(self, hidden_dim, key):
        # GCNConv init: glorot weight, zero bias.
        limit = (6.0 / (hidden_dim + hidden_dim)) ** 0.5
        self.weight = jax.random.uniform(
            key, (hidden_dim, hidden_dim), minval=-limit, maxval=limit,
            dtype=jnp.float32)
        self.bias = jnp.zeros((hidden_dim,), dtype=jnp.float32)

    def __call__(self, x, edge_index, edge_attr=None):
        # edge_attr is ignored by the reference module as well.
        return _gcn_conv_jit(x, edge_index, self.weight, self.bias)


if __name__ == "__main__":
    key = jax.random.PRNGKey(0)
    k_w, k_x, k_src, k_dst = jax.random.split(key, 4)

    num_nodes = 16
    hidden_dim = 32
    num_edges = 40

    layer = BaseLayerPallas(hidden_dim, k_w)

    x = jax.random.normal(k_x, (num_nodes, hidden_dim), dtype=jnp.float32)
    src = jax.random.randint(k_src, (num_edges,), 0, num_nodes, dtype=jnp.int32)
    dst = jax.random.randint(k_dst, (num_edges,), 0, num_nodes, dtype=jnp.int32)
    edge_index = jnp.stack([src, dst], axis=0)  # [2, E]

    out = layer(x, edge_index)
    out = jax.block_until_ready(out)

    # Plain-JAX f32 reference (same self-loop semantics as PyG gcn_norm).
    adj = jnp.zeros((num_nodes, num_nodes)).at[dst, src].add(1.0)
    di = jnp.arange(num_nodes)
    adj = adj.at[di, di].set(jnp.maximum(adj[di, di], 1.0))
    deg = adj.sum(1)
    dinv = jnp.where(deg > 0, jax.lax.rsqrt(deg), 0.0)
    a_hat = dinv[:, None] * adj * dinv[None, :]
    ref = a_hat @ (x @ layer.weight) + layer.bias[None, :]

    # bf16 XW operand (f32 accumulation, f32 row scaling) -> relaxed tolerance.
    assert out.shape == ref.shape, "shape mismatch vs reference"
    assert jnp.allclose(out, ref, atol=5e-2, rtol=5e-2), "mismatch vs reference"

    print("KERNEL_OK")
</pallas_src>

<mosaic_0001>
module attributes {stable_mosaic.version = 11 : i64} {
  func.func @kernel(%arg0: i32, %arg1: i32, %arg2: memref<256x256xi8, #tpu.memory_space<vmem>>, %arg3: memref<256x128xbf16, #tpu.memory_space<vmem>>, %arg4: memref<256x1xf32, #tpu.memory_space<vmem>>, %arg5: memref<1x128xf32, #tpu.memory_space<vmem>>, %arg6: memref<256x128xf32, #tpu.memory_space<vmem>>) attributes {dimension_semantics = [#tpu.dimension_semantics<parallel>, #tpu.dimension_semantics<arbitrary>], iteration_bounds = array<i64: 1, 1>, scalar_prefetch = 0 : i64, scratch_operands = 0 : i64, tpu.core_type = #tpu.core_type<tc>, window_params = [{transform_indices = @transform_0, window_bounds = array<i64: 256, 256>}, {pipeline_mode = #tpu.pipeline_mode<synchronous>, transform_indices = @transform_1, window_bounds = array<i64: 256, 128>}, {transform_indices = @transform_2, window_bounds = array<i64: 256, 1>}, {pipeline_mode = #tpu.pipeline_mode<synchronous>, transform_indices = @transform_3, window_bounds = array<i64: 1, 128>}, {transform_indices = @transform_4, window_bounds = array<i64: 256, 128>}]} {
    %c0_i32 = arith.constant 0 : i32
    %0 = arith.cmpi eq, %arg1, %c0_i32 : i32
    %1 = arith.extui %0 : i1 to i32
    %c0_i32_0 = arith.constant 0 : i32
    %2 = arith.cmpi ne, %1, %c0_i32_0 : i32
    scf.if %2 {
      %cst_9 = arith.constant 0.000000e+00 : f32
      %17 = vector.broadcast %cst_9 : f32 to vector<256x128xf32>
      %c0_10 = arith.constant 0 : index
      %c0_11 = arith.constant 0 : index
      %18 = vector.load %arg6[%c0_10, %c0_11] : memref<256x128xf32, #tpu.memory_space<vmem>>, vector<256x128xf32>
      tpu.vector_store %arg6[%c0_10, %c0_11], %17 {strides = array<i32>} : memref<256x128xf32, #tpu.memory_space<vmem>>, vector<256x128xf32>,
    } else {
    }
    %c0 = arith.constant 0 : index
    %c0_1 = arith.constant 0 : index
    %3 = vector.load %arg2[%c0, %c0_1] : memref<256x256xi8, #tpu.memory_space<vmem>>, vector<256x256xi8>
    %4 = arith.sitofp %3 : vector<256x256xi8> to vector<256x256xf32>
    %5 = arith.truncf %4 : vector<256x256xf32> to vector<256x256xbf16>
    %c256_i32 = arith.constant 256 : i32
    %6 = arith.muli %arg1, %c256_i32 : i32
    %7 = tpu.assume_multiple %6, 256 : i32
    %8 = arith.index_cast %7 : i32 to index
    %c0_2 = arith.constant 0 : index
    %9 = vector.load %arg3[%8, %c0_2] : memref<256x128xbf16, #tpu.memory_space<vmem>>, vector<256x128xbf16>
    %c0_3 = arith.constant 0 : index
    %c0_4 = arith.constant 0 : index
    %10 = vector.load %arg6[%c0_3, %c0_4] : memref<256x128xf32, #tpu.memory_space<vmem>>, vector<256x128xf32>
    %cst = arith.constant dense<0.000000e+00> : vector<256x128xf32>
    %11 = tpu.matmul %5, %9, %cst {dimension_numbers = #tpu.dot_dimension_numbers<[1], [0], [0], [1], [0, 0, 1, 1], [], []>} : vector<256x256xbf16>, vector<256x128xbf16>, vector<256x128xf32> -> vector<256x128xf32>
    %12 = arith.addf %10, %11 : vector<256x128xf32>
    %c0_5 = arith.constant 0 : index
    %c0_6 = arith.constant 0 : index
    %13 = vector.load %arg6[%c0_5, %c0_6] : memref<256x128xf32, #tpu.memory_space<vmem>>, vector<256x128xf32>
    tpu.vector_store %arg6[%c0_5, %c0_6], %12 {strides = array<i32>} : memref<256x128xf32, #tpu.memory_space<vmem>>, vector<256x128xf32>,
    %c0_i32_7 = arith.constant 0 : i32
    %14 = arith.cmpi eq, %arg1, %c0_i32_7 : i32
    %15 = arith.extui %14 : i1 to i32
    %c0_i32_8 = arith.constant 0 : i32
    %16 = arith.cmpi ne, %15, %c0_i32_8 : i32
    scf.if %16 {
      %c0_9 = arith.constant 0 : index
      %c0_10 = arith.constant 0 : index
      %17 = vector.load %arg6[%c0_9, %c0_10] : memref<256x128xf32, #tpu.memory_space<vmem>>, vector<256x128xf32>
      %c0_11 = arith.constant 0 : index
      %c0_12 = arith.constant 0 : index
      %18 = vector.load %arg4[%c0_11, %c0_12] : memref<256x1xf32, #tpu.memory_space<vmem>>, vector<256x1xf32>
      %19 = vector.broadcast %18 : vector<256x1xf32> to vector<256x128xf32>
      %20 = arith.mulf %17, %19 : vector<256x128xf32>
      %c0_13 = arith.constant 0 : index
      %c0_14 = arith.constant 0 : index
      %21 = vector.load %arg5[%c0_13, %c0_14] : memref<1x128xf32, #tpu.memory_space<vmem>>, vector<1x128xf32>
      %22 = vector.broadcast %21 : vector<1x128xf32> to vector<256x128xf32>
      %23 = arith.addf %20, %22 : vector<256x128xf32>
      %c0_15 = arith.constant 0 : index
      %c0_16 = arith.constant 0 : index
      %24 = vector.load %arg6[%c0_15, %c0_16] : memref<256x128xf32, #tpu.memory_space<vmem>>, vector<256x128xf32>
      tpu.vector_store %arg6[%c0_15, %c0_16], %23 {strides = array<i32>} : memref<256x128xf32, #tpu.memory_space<vmem>>, vector<256x128xf32>,
    } else {
    }
    return
  }
  func.func @transform_0(%arg0: i32, %arg1: i32) -> (i32, i32) {
    %c0_i32 = arith.constant 0 : i32
    return %arg0, %arg1 : i32, i32
  }
  func.func @transform_1(%arg0: i32, %arg1: i32) -> (i32, i32) {
    %c0_i32 = arith.constant 0 : i32
    %c0_i32_0 = arith.constant 0 : i32
    %c0_i32_1 = arith.constant 0 : i32
    return %c0_i32, %c0_i32_0 : i32, i32
  }
  func.func @transform_2(%arg0: i32, %arg1: i32) -> (i32, i32) {
    %c0_i32 = arith.constant 0 : i32
    %c0_i32_0 = arith.constant 0 : i32
    return %arg0, %c0_i32 : i32, i32
  }
  func.func @transform_3(%arg0: i32, %arg1: i32) -> (i32, i32) {
    %c0_i32 = arith.constant 0 : i32
    %c0_i32_0 = arith.constant 0 : i32
    %c0_i32_1 = arith.constant 0 : i32
    return %c0_i32, %c0_i32_0 : i32, i32
  }
  func.func @transform_4(%arg0: i32, %arg1: i32) -> (i32, i32) {
    %c0_i32 = arith.constant 0 : i32
    %c0_i32_0 = arith.constant 0 : i32
    return %arg0, %c0_i32 : i32, i32
  }
}

</mosaic_0001>

<llo_original>
// kernel: gcn_conv_pallas.1
$region0: #{gcn_conv_pallas.1}
  #allocation0 [shape = 'u32[]', space=smem, size = 0x4, offset = 0x4, fixed_abs, tag = 'smem constant byte address 0x4 - core index']
  #allocation1 [shape = 'u32[72,128]{1,0:T(1,128)}', space=vmem, size = 0x9000, scoped, tag = 'internal scratch']
  %s0 = inlined_call_operand.vmem [shape: s8[256,256], index: 0, kind: input, shape index: {}]
  %s1 = inlined_call_operand.vmem [shape: bf16[256,128], index: 1, kind: input, shape index: {}]
  %s2 = inlined_call_operand.vmem [shape: f32[256,1], index: 2, kind: input, shape index: {}]
  %s3 = inlined_call_operand.vmem [shape: f32[1,128], index: 3, kind: input, shape index: {}]
  %s4 = inlined_call_operand.vmem [shape: f32[256,128], index: 4, kind: output, shape index: {}]
  %s5 = sld [smem:[#allocation0]]
  $region34: #{gcn_conv_pallas.1} parent=0
    _
  %s7 = ssub.s32 1, %s5
  %s8 = scalar_select 0, %s7, %s5
  // Predicated region
  $region2: #{gcn_conv_pallas.1} parent=0 // pred_check
    _
  $region3: #{gcn_conv_pallas.1} parent=0 // pred_check_branch
    %10 = sbr.rel (0) target = $region5
  $region4: #{gcn_conv_pallas.1} parent=0 // pred_region
    _
  $region5: #{gcn_conv_pallas.1} parent=0 // pred_fallthru
    _
  // Predicated region
  $region6: #{gcn_conv_pallas.1} parent=0 // pred_check
    _
  $region7: #{gcn_conv_pallas.1} parent=0 // pred_check_branch
    %12 = sbr.rel (0) target = $region9
  $region8: #{gcn_conv_pallas.1} parent=0 // pred_region
    _
  $region9: #{gcn_conv_pallas.1} parent=0 // pred_fallthru
    _
  // Predicated region
  $region10: #{gcn_conv_pallas.1} parent=0 // pred_check
    _
  $region11: #{gcn_conv_pallas.1} parent=0 // pred_check_branch
    %14 = sbr.rel (0) target = $region13
  $region12: #{gcn_conv_pallas.1} parent=0 // pred_region
    _
  $region13: #{gcn_conv_pallas.1} parent=0 // pred_fallthru
    _
  // Predicated region
  $region14: #{gcn_conv_pallas.1} parent=0 // pred_check
    _
  $region15: #{gcn_conv_pallas.1} parent=0 // pred_check_branch
    %16 = sbr.rel (0) target = $region17
  $region16: #{gcn_conv_pallas.1} parent=0 // pred_region
    _
  $region17: #{gcn_conv_pallas.1} parent=0 // pred_fallthru
    _
  %p17 = scmp.eq.s32.totalorder 0, 0
  // Predicated region
  $region18: #{gcn_conv_pallas.1} parent=0 // pred_check
    %p18 = pneg %p17
  $region19: #{gcn_conv_pallas.1} parent=0 // pred_check_branch
    %20 = sbr.rel (%p18) target = $region21
  $region20: #{gcn_conv_pallas.1} parent=0 // pred_region
    %21 = vst [vmem:[%s4] sm:$0xff] 0.0
    %22 = vst [vmem:[%s4 + $0x8] sm:$0xff] 0.0
    %23 = vst [vmem:[%s4 + $0x10] sm:$0xff] 0.0
    %24 = vst [vmem:[%s4 + $0x18] sm:$0xff] 0.0
    %25 = vst [vmem:[%s4 + $0x20] sm:$0xff] 0.0
    %26 = vst [vmem:[%s4 + $0x28] sm:$0xff] 0.0
    %27 = vst [vmem:[%s4 + $0x30] sm:$0xff] 0.0
    %28 = vst [vmem:[%s4 + $0x38] sm:$0xff] 0.0
    %29 = vst [vmem:[%s4 + $0x40] sm:$0xff] 0.0
    %30 = vst [vmem:[%s4 + $0x48] sm:$0xff] 0.0
    %31 = vst [vmem:[%s4 + $0x50] sm:$0xff] 0.0
    %32 = vst [vmem:[%s4 + $0x58] sm:$0xff] 0.0
    %33 = vst [vmem:[%s4 + $0x60] sm:$0xff] 0.0
    %34 = vst [vmem:[%s4 + $0x68] sm:$0xff] 0.0
    %35 = vst [vmem:[%s4 + $0x70] sm:$0xff] 0.0
    %36 = vst [vmem:[%s4 + $0x78] sm:$0xff] 0.0
    %37 = vst [vmem:[%s4 + $0x80] sm:$0xff] 0.0
    %38 = vst [vmem:[%s4 + $0x88] sm:$0xff] 0.0
    %39 = vst [vmem:[%s4 + $0x90] sm:$0xff] 0.0
    %40 = vst [vmem:[%s4 + $0x98] sm:$0xff] 0.0
    %41 = vst [vmem:[%s4 + $0xa0] sm:$0xff] 0.0
    %42 = vst [vmem:[%s4 + $0xa8] sm:$0xff] 0.0
    %43 = vst [vmem:[%s4 + $0xb0] sm:$0xff] 0.0
    %44 = vst [vmem:[%s4 + $0xb8] sm:$0xff] 0.0
    %45 = vst [vmem:[%s4 + $0xc0] sm:$0xff] 0.0
    %46 = vst [vmem:[%s4 + $0xc8] sm:$0xff] 0.0
    %47 = vst [vmem:[%s4 + $0xd0] sm:$0xff] 0.0
    %48 = vst [vmem:[%s4 + $0xd8] sm:$0xff] 0.0
    %49 = vst [vmem:[%s4 + $0xe0] sm:$0xff] 0.0
    %50 = vst [vmem:[%s4 + $0xe8] sm:$0xff] 0.0
    %51 = vst [vmem:[%s4 + $0xf0] sm:$0xff] 0.0
    %52 = vst [vmem:[%s4 + $0xf8] sm:$0xff] 0.0
  $region21: #{gcn_conv_pallas.1} parent=0 // pred_fallthru
    _
  %v53 = vld [vmem:[%s0] sm:$0xf]
  %v54 = vld [vmem:[%s0 + $0x4] sm:$0xf]
  %v55 = vld [vmem:[%s0 + $0x8] sm:$0xf]
  %v56 = vld [vmem:[%s0 + $0xc] sm:$0xf]
  %v57 = vld [vmem:[%s0 + $0x10] sm:$0xf]
  %v58 = vld [vmem:[%s0 + $0x14] sm:$0xf]
  %v59 = vld [vmem:[%s0 + $0x18] sm:$0xf]
  %v60 = vld [vmem:[%s0 + $0x1c] sm:$0xf]
  %v61 = vld [vmem:[%s0 + $0x20] sm:$0xf]
  %v62 = vld [vmem:[%s0 + $0x24] sm:$0xf]
  %v63 = vld [vmem:[%s0 + $0x28] sm:$0xf]
  %v64 = vld [vmem:[%s0 + $0x2c] sm:$0xf]
  %v65 = vld [vmem:[%s0 + $0x30] sm:$0xf]
  %v66 = vld [vmem:[%s0 + $0x34] sm:$0xf]
  %v67 = vld [vmem:[%s0 + $0x38] sm:$0xf]
  %v68 = vld [vmem:[%s0 + $0x3c] sm:$0xf]
  %v69 = vld [vmem:[%s0 + $0x40] sm:$0xf]
  %v70 = vld [vmem:[%s0 + $0x44] sm:$0xf]
  %v71 = vld [vmem:[%s0 + $0x48] sm:$0xf]
  %v72 = vld [vmem:[%s0 + $0x4c] sm:$0xf]
  %v73 = vld [vmem:[%s0 + $0x50] sm:$0xf]
  %v74 = vld [vmem:[%s0 + $0x54] sm:$0xf]
  %v75 = vld [vmem:[%s0 + $0x58] sm:$0xf]
  %v76 = vld [vmem:[%s0 + $0x5c] sm:$0xf]
  %v77 = vld [vmem:[%s0 + $0x60] sm:$0xf]
  %v78 = vld [vmem:[%s0 + $0x64] sm:$0xf]
  %v79 = vld [vmem:[%s0 + $0x68] sm:$0xf]
  %v80 = vld [vmem:[%s0 + $0x6c] sm:$0xf]
  %v81 = vld [vmem:[%s0 + $0x70] sm:$0xf]
  %v82 = vld [vmem:[%s0 + $0x74] sm:$0xf]
  %v83 = vld [vmem:[%s0 + $0x78] sm:$0xf]
  %v84 = vld [vmem:[%s0 + $0x7c] sm:$0xf]
  %v85 = vunpack.c.0.s8 %v53
  %v86 = vunpack.c.1.s8 %v53
  %v87 = vunpack.c.0.s8 %v54
  %v88 = vunpack.c.1.s8 %v54
  %v89 = vunpack.c.0.s8 %v55
  %v90 = vunpack.c.1.s8 %v55
  %v91 = vunpack.c.0.s8 %v56
  %v92 = vunpack.c.1.s8 %v56
  %v93 = vunpack.c.0.s8 %v57
  %v94 = vunpack.c.1.s8 %v57
  %v95 = vunpack.c.0.s8 %v58
  %v96 = vunpack.c.1.s8 %v58
  %v97 = vunpack.c.0.s8 %v59
  %v98 = vunpack.c.1.s8 %v59
  %v99 = vunpack.c.0.s8 %v60
  %v100 = vunpack.c.1.s8 %v60
  %v101 = vunpack.c.0.s8 %v61
  %v102 = vunpack.c.1.s8 %v61
  %v103 = vunpack.c.0.s8 %v62
  %v104 = vunpack.c.1.s8 %v62
  %v105 = vunpack.c.0.s8 %v63
  %v106 = vunpack.c.1.s8 %v63
  %v107 = vunpack.c.0.s8 %v64
  %v108 = vunpack.c.1.s8 %v64
  %v109 = vunpack.c.0.s8 %v65
  %v110 = vunpack.c.1.s8 %v65
  %v111 = vunpack.c.0.s8 %v66
  %v112 = vunpack.c.1.s8 %v66
  %v113 = vunpack.c.0.s8 %v67
  %v114 = vunpack.c.1.s8 %v67
  %v115 = vunpack.c.0.s8 %v68
  %v116 = vunpack.c.1.s8 %v68
  %v117 = vunpack.c.0.s8 %v69
  %v118 = vunpack.c.1.s8 %v69
  %v119 = vunpack.c.0.s8 %v70
  %v120 = vunpack.c.1.s8 %v70
  %v121 = vunpack.c.0.s8 %v71
  %v122 = vunpack.c.1.s8 %v71
  %v123 = vunpack.c.0.s8 %v72
  %v124 = vunpack.c.1.s8 %v72
  %v125 = vunpack.c.0.s8 %v73
  %v126 = vunpack.c.1.s8 %v73
  %v127 = vunpack.c.0.s8 %v74
  %v128 = vunpack.c.1.s8 %v74
  %v129 = vunpack.c.0.s8 %v75
  %v130 = vunpack.c.1.s8 %v75
  %v131 = vunpack.c.0.s8 %v76
  %v132 = vunpack.c.1.s8 %v76
  %v133 = vunpack.c.0.s8 %v77
  %v134 = vunpack.c.1.s8 %v77
  %v135 = vunpack.c.0.s8 %v78
  %v136 = vunpack.c.1.s8 %v78
  %v137 = vunpack.c.0.s8 %v79
  %v138 = vunpack.c.1.s8 %v79
  %v139 = vunpack.c.0.s8 %v80
  %v140 = vunpack.c.1.s8 %v80
  %v141 = vunpack.c.0.s8 %v81
  %v142 = vunpack.c.1.s8 %v81
  %v143 = vunpack.c.0.s8 %v82
  %v144 = vunpack.c.1.s8 %v82
  %v145 = vunpack.c.0.s8 %v83
  %v146 = vunpack.c.1.s8 %v83
  %v147 = vunpack.c.0.s8 %v84
  %v148 = vunpack.c.1.s8 %v84
  %v149 = vcvt.s32.f32 %v85
  %v150 = vcvt.s32.f32 %v86
  %v151 = vcvt.s32.f32 %v87
  %v152 = vcvt.s32.f32 %v88
  %v153 = vcvt.s32.f32 %v89
  %v154 = vcvt.s32.f32 %v90
  %v155 = vcvt.s32.f32 %v91
  %v156 = vcvt.s32.f32 %v92
  %v157 = vcvt.s32.f32 %v93
  %v158 = vcvt.s32.f32 %v94
  %v159 = vcvt.s32.f32 %v95
  %v160 = vcvt.s32.f32 %v96
  %v161 = vcvt.s32.f32 %v97
  %v162 = vcvt.s32.f32 %v98
  %v163 = vcvt.s32.f32 %v99
  %v164 = vcvt.s32.f32 %v100
  %v165 = vcvt.s32.f32 %v101
  %v166 = vcvt.s32.f32 %v102
  %v167 = vcvt.s32.f32 %v103
  %v168 = vcvt.s32.f32 %v104
  %v169 = vcvt.s32.f32 %v105
  %v170 = vcvt.s32.f32 %v106
  %v171 = vcvt.s32.f32 %v107
  %v172 = vcvt.s32.f32 %v108
  %v173 = vcvt.s32.f32 %v109
  %v174 = vcvt.s32.f32 %v110
  %v175 = vcvt.s32.f32 %v111
  %v176 = vcvt.s32.f32 %v112
  %v177 = vcvt.s32.f32 %v113
  %v178 = vcvt.s32.f32 %v114
  %v179 = vcvt.s32.f32 %v115
  %v180 = vcvt.s32.f32 %v116
  %v181 = vcvt.s32.f32 %v117
  %v182 = vcvt.s32.f32 %v118
  %v183 = vcvt.s32.f32 %v119
  %v184 = vcvt.s32.f32 %v120
  %v185 = vcvt.s32.f32 %v121
  %v186 = vcvt.s32.f32 %v122
  %v187 = vcvt.s32.f32 %v123
  %v188 = vcvt.s32.f32 %v124
  %v189 = vcvt.s32.f32 %v125
  %v190 = vcvt.s32.f32 %v126
  %v191 = vcvt.s32.f32 %v127
  %v192 = vcvt.s32.f32 %v128
  %v193 = vcvt.s32.f32 %v129
  %v194 = vcvt.s32.f32 %v130
  %v195 = vcvt.s32.f32 %v131
  %v196 = vcvt.s32.f32 %v132
  %v197 = vcvt.s32.f32 %v133
  %v198 = vcvt.s32.f32 %v134
  %v199 = vcvt.s32.f32 %v135
  %v200 = vcvt.s32.f32 %v136
  %v201 = vcvt.s32.f32 %v137
  %v202 = vcvt.s32.f32 %v138
  %v203 = vcvt.s32.f32 %v139
  %v204 = vcvt.s32.f32 %v140
  %v205 = vcvt.s32.f32 %v141
  %v206 = vcvt.s32.f32 %v142
  %v207 = vcvt.s32.f32 %v143
  %v208 = vcvt.s32.f32 %v144
  %v209 = vcvt.s32.f32 %v145
  %v210 = vcvt.s32.f32 %v146
  %v211 = vcvt.s32.f32 %v147
  %v212 = vcvt.s32.f32 %v148
  %v213 = vpack.c.bf16 %v151, %v149
  %v214 = vpack.c.bf16 %v152, %v150
  %v215 = vpack.c.bf16 %v155, %v153
  %v216 = vpack.c.bf16 %v156, %v154
  %v217 = vpack.c.bf16 %v159, %v157
  %v218 = vpack.c.bf16 %v160, %v158
  %v219 = vpack.c.bf16 %v163, %v161
  %v220 = vpack.c.bf16 %v164, %v162
  %v221 = vpack.c.bf16 %v167, %v165
  %v222 = vpack.c.bf16 %v168, %v166
  %v223 = vpack.c.bf16 %v171, %v169
  %v224 = vpack.c.bf16 %v172, %v170
  %v225 = vpack.c.bf16 %v175, %v173
  %v226 = vpack.c.bf16 %v176, %v174
  %v227 = vpack.c.bf16 %v179, %v177
  %v228 = vpack.c.bf16 %v180, %v178
  %v229 = vpack.c.bf16 %v183, %v181
  %v230 = vpack.c.bf16 %v184, %v182
  %v231 = vpack.c.bf16 %v187, %v185
  %v232 = vpack.c.bf16 %v188, %v186
  %v233 = vpack.c.bf16 %v191, %v189
  %v234 = vpack.c.bf16 %v192, %v190
  %v235 = vpack.c.bf16 %v195, %v193
  %v236 = vpack.c.bf16 %v196, %v194
  %v237 = vpack.c.bf16 %v199, %v197
  %v238 = vpack.c.bf16 %v200, %v198
  %v239 = vpack.c.bf16 %v203, %v201
  %v240 = vpack.c.bf16 %v204, %v202
  %v241 = vpack.c.bf16 %v207, %v205
  %v242 = vpack.c.bf16 %v208, %v206
  %v243 = vpack.c.bf16 %v211, %v209
  %v244 = vpack.c.bf16 %v212, %v210
  %s245 = smul.u32 0, 256
  %s246 = sshra.s32 %s245, 3
  %s247 = sand.u32 %s245, 7
  %s248 = smul.addr %s246, 4
  %s249 = scalar_lea.vmem %s1, %s248
  %v250 = vld [vmem:[%s249] sm:$0xf]
  %v251 = vld [vmem:[%s249 + $0x4] sm:$0xf]
  %v252 = vld [vmem:[%s249 + $0x8] sm:$0xf]
  %v253 = vld [vmem:[%s249 + $0xc] sm:$0xf]
  %v254 = vld [vmem:[%s249 + $0x10] sm:$0xf]
  %v255 = vld [vmem:[%s249 + $0x14] sm:$0xf]
  %v256 = vld [vmem:[%s249 + $0x18] sm:$0xf]
  %v257 = vld [vmem:[%s249 + $0x1c] sm:$0xf]
  %v258 = vld [vmem:[%s249 + $0x20] sm:$0xf]
  %v259 = vld [vmem:[%s249 + $0x24] sm:$0xf]
  %v260 = vld [vmem:[%s249 + $0x28] sm:$0xf]
  %v261 = vld [vmem:[%s249 + $0x2c] sm:$0xf]
  %v262 = vld [vmem:[%s249 + $0x30] sm:$0xf]
  %v263 = vld [vmem:[%s249 + $0x34] sm:$0xf]
  %v264 = vld [vmem:[%s249 + $0x38] sm:$0xf]
  %v265 = vld [vmem:[%s249 + $0x3c] sm:$0xf]
  %v266 = vld [vmem:[%s249 + $0x40] sm:$0xf]
  %v267 = vld [vmem:[%s249 + $0x44] sm:$0xf]
  %v268 = vld [vmem:[%s249 + $0x48] sm:$0xf]
  %v269 = vld [vmem:[%s249 + $0x4c] sm:$0xf]
  %v270 = vld [vmem:[%s249 + $0x50] sm:$0xf]
  %v271 = vld [vmem:[%s249 + $0x54] sm:$0xf]
  %v272 = vld [vmem:[%s249 + $0x58] sm:$0xf]
  %v273 = vld [vmem:[%s249 + $0x5c] sm:$0xf]
  %v274 = vld [vmem:[%s249 + $0x60] sm:$0xf]
  %v275 = vld [vmem:[%s249 + $0x64] sm:$0xf]
  %v276 = vld [vmem:[%s249 + $0x68] sm:$0xf]
  %v277 = vld [vmem:[%s249 + $0x6c] sm:$0xf]
  %v278 = vld [vmem:[%s249 + $0x70] sm:$0xf]
  %v279 = vld [vmem:[%s249 + $0x74] sm:$0xf]
  %v280 = vld [vmem:[%s249 + $0x78] sm:$0xf]
  %v281 = vld [vmem:[%s249 + $0x7c] sm:$0xf]
  %v282 = vld [vmem:[%s4] sm:$0xff]
  %v283 = vld [vmem:[%s4 + $0x8] sm:$0xff]
  %v284 = vld [vmem:[%s4 + $0x10] sm:$0xff]
  %v285 = vld [vmem:[%s4 + $0x18] sm:$0xff]
  %v286 = vld [vmem:[%s4 + $0x20] sm:$0xff]
  %v287 = vld [vmem:[%s4 + $0x28] sm:$0xff]
  %v288 = vld [vmem:[%s4 + $0x30] sm:$0xff]
  %v289 = vld [vmem:[%s4 + $0x38] sm:$0xff]
  %v290 = vld [vmem:[%s4 + $0x40] sm:$0xff]
  %v291 = vld [vmem:[%s4 + $0x48] sm:$0xff]
  %v292 = vld [vmem:[%s4 + $0x50] sm:$0xff]
  %v293 = vld [vmem:[%s4 + $0x58] sm:$0xff]
  %v294 = vld [vmem:[%s4 + $0x60] sm:$0xff]
  %v295 = vld [vmem:[%s4 + $0x68] sm:$0xff]
  %v296 = vld [vmem:[%s4 + $0x70] sm:$0xff]
  %v297 = vld [vmem:[%s4 + $0x78] sm:$0xff]
  %v298 = vld [vmem:[%s4 + $0x80] sm:$0xff]
  %v299 = vld [vmem:[%s4 + $0x88] sm:$0xff]
  %v300 = vld [vmem:[%s4 + $0x90] sm:$0xff]
  %v301 = vld [vmem:[%s4 + $0x98] sm:$0xff]
  %v302 = vld [vmem:[%s4 + $0xa0] sm:$0xff]
  %v303 = vld [vmem:[%s4 + $0xa8] sm:$0xff]
  %v304 = vld [vmem:[%s4 + $0xb0] sm:$0xff]
  %v305 = vld [vmem:[%s4 + $0xb8] sm:$0xff]
  %v306 = vld [vmem:[%s4 + $0xc0] sm:$0xff]
  %v307 = vld [vmem:[%s4 + $0xc8] sm:$0xff]
  %v308 = vld [vmem:[%s4 + $0xd0] sm:$0xff]
  %v309 = vld [vmem:[%s4 + $0xd8] sm:$0xff]
  %v310 = vld [vmem:[%s4 + $0xe0] sm:$0xff]
  %v311 = vld [vmem:[%s4 + $0xe8] sm:$0xff]
  %v312 = vld [vmem:[%s4 + $0xf0] sm:$0xff]
  %v313 = vld [vmem:[%s4 + $0xf8] sm:$0xff]
  %v346 = vunpack.c.l.b16 %v250
  %v347 = vunpack.c.l.b16 %v251
  %v348 = vunpack.c.l.b16 %v252
  %v349 = vunpack.c.l.b16 %v253
  %v350 = vunpack.c.l.b16 %v254
  %v351 = vunpack.c.l.b16 %v255
  %v352 = vunpack.c.l.b16 %v256
  %v353 = vunpack.c.l.b16 %v257
  %v354 = vunpack.c.l.b16 %v258
  %v355 = vunpack.c.l.b16 %v259
  %v356 = vunpack.c.l.b16 %v260
  %v357 = vunpack.c.l.b16 %v261
  %v358 = vunpack.c.l.b16 %v262
  %v359 = vunpack.c.l.b16 %v263
  %v360 = vunpack.c.l.b16 %v264
  %v361 = vunpack.c.l.b16 %v265
  %v362 = vunpack.c.l.b16 %v266
  %v363 = vunpack.c.l.b16 %v267
  %v364 = vunpack.c.l.b16 %v268
  %v365 = vunpack.c.l.b16 %v269
  %v366 = vunpack.c.l.b16 %v270
  %v367 = vunpack.c.l.b16 %v271
  %v368 = vunpack.c.l.b16 %v272
  %v369 = vunpack.c.l.b16 %v273
  %v370 = vunpack.c.l.b16 %v274
  %v371 = vunpack.c.l.b16 %v275
  %v372 = vunpack.c.l.b16 %v276
  %v373 = vunpack.c.l.b16 %v277
  %v374 = vunpack.c.l.b16 %v278
  %v375 = vunpack.c.l.b16 %v279
  %v376 = vunpack.c.l.b16 %v280
  %v377 = vunpack.c.l.b16 %v281
  %v378 = vpack.c.b16 %v347, %v346
  %v379 = vpack.c.b16 %v349, %v348
  %v380 = vpack.c.b16 %v351, %v350
  %v381 = vpack.c.b16 %v353, %v352
  %v382 = vpack.c.b16 %v355, %v354
  %v383 = vpack.c.b16 %v357, %v356
  %v384 = vpack.c.b16 %v359, %v358
  %v385 = vpack.c.b16 %v361, %v360
  %v386 = vpack.c.b16 %v363, %v362
  %v387 = vpack.c.b16 %v365, %v364
  %v388 = vpack.c.b16 %v367, %v366
  %v389 = vpack.c.b16 %v369, %v368
  %v390 = vpack.c.b16 %v371, %v370
  %v391 = vpack.c.b16 %v373, %v372
  %v392 = vpack.c.b16 %v375, %v374
  %v393 = vpack.c.b16 %v377, %v376
  %410 = vmatpush.bf16.msra.mxu0 %v385
  %411 = vmatpush.bf16.msra.mxu0 %v384
  %412 = vmatpush.bf16.msra.mxu0 %v383
  %413 = vmatpush.bf16.msra.mxu0 %v382
  %414 = vmatpush.bf16.msra.mxu0 %v381
  %415 = vmatpush.bf16.msra.mxu0 %v380
  %416 = vmatpush.bf16.msra.mxu0 %v379
  %417 = vmatpush.bf16.msra.mxu0 %v378
  %418 = vmatmul.bf16.gmra.mxu0 %v213
  %v419 = vpop.f32.mrf.mxu0
  %v420 = vadd.f32 0.0, %v419
  %v421 = vpop.f32.mrf.mxu0
  %v422 = vadd.f32 0.0, %v421
  %423 = vmatmul.bf16.gmra.mxu0 %v215
  %v424 = vpop.f32.mrf.mxu0
  %v425 = vadd.f32 0.0, %v424
  %v426 = vpop.f32.mrf.mxu0
  %v427 = vadd.f32 0.0, %v426
  %428 = vmatmul.bf16.gmra.mxu0 %v217
  %v429 = vpop.f32.mrf.mxu0
  %v430 = vadd.f32 0.0, %v429
  %v431 = vpop.f32.mrf.mxu0
  %v432 = vadd.f32 0.0, %v431
  %433 = vmatmul.bf16.gmra.mxu0 %v219
  %v434 = vpop.f32.mrf.mxu0
  %v435 = vadd.f32 0.0, %v434
  %v436 = vpop.f32.mrf.mxu0
  %v437 = vadd.f32 0.0, %v436
  %438 = vmatmul.bf16.gmra.mxu0 %v221
  %v439 = vpop.f32.mrf.mxu0
  %v440 = vadd.f32 0.0, %v439
  %v441 = vpop.f32.mrf.mxu0
  %v442 = vadd.f32 0.0, %v441
  %443 = vmatmul.bf16.gmra.mxu0 %v223
  %v444 = vpop.f32.mrf.mxu0
  %v445 = vadd.f32 0.0, %v444
  %v446 = vpop.f32.mrf.mxu0
  %v447 = vadd.f32 0.0, %v446
  %448 = vmatmul.bf16.gmra.mxu0 %v225
  %v449 = vpop.f32.mrf.mxu0
  %v450 = vadd.f32 0.0, %v449
  %v451 = vpop.f32.mrf.mxu0
  %v452 = vadd.f32 0.0, %v451
  %453 = vmatmul.bf16.gmra.mxu0 %v227
  %v454 = vpop.f32.mrf.mxu0
  %v455 = vadd.f32 0.0, %v454
  %v456 = vpop.f32.mrf.mxu0
  %v457 = vadd.f32 0.0, %v456
  %458 = vmatmul.bf16.gmra.mxu0 %v229
  %v459 = vpop.f32.mrf.mxu0
  %v460 = vadd.f32 0.0, %v459
  %v461 = vpop.f32.mrf.mxu0
  %v462 = vadd.f32 0.0, %v461
  %463 = vmatmul.bf16.gmra.mxu0 %v231
  %v464 = vpop.f32.mrf.mxu0
  %v465 = vadd.f32 0.0, %v464
  %v466 = vpop.f32.mrf.mxu0
  %v467 = vadd.f32 0.0, %v466
  %468 = vmatmul.bf16.gmra.mxu0 %v233
  %v469 = vpop.f32.mrf.mxu0
  %v470 = vadd.f32 0.0, %v469
  %v471 = vpop.f32.mrf.mxu0
  %v472 = vadd.f32 0.0, %v471
  %473 = vmatmul.bf16.gmra.mxu0 %v235
  %v474 = vpop.f32.mrf.mxu0
  %v475 = vadd.f32 0.0, %v474
  %v476 = vpop.f32.mrf.mxu0
  %v477 = vadd.f32 0.0, %v476
  %478 = vmatmul.bf16.gmra.mxu0 %v237
  %v479 = vpop.f32.mrf.mxu0
  %v480 = vadd.f32 0.0, %v479
  %v481 = vpop.f32.mrf.mxu0
  %v482 = vadd.f32 0.0, %v481
  %483 = vmatmul.bf16.gmra.mxu0 %v239
  %v484 = vpop.f32.mrf.mxu0
  %v485 = vadd.f32 0.0, %v484
  %v486 = vpop.f32.mrf.mxu0
  %v487 = vadd.f32 0.0, %v486
  %488 = vmatmul.bf16.gmra.mxu0 %v241
  %v489 = vpop.f32.mrf.mxu0
  %v490 = vadd.f32 0.0, %v489
  %v491 = vpop.f32.mrf.mxu0
  %v492 = vadd.f32 0.0, %v491
  %493 = vmatmul.bf16.gmra.mxu0 %v243
  %v494 = vpop.f32.mrf.mxu0
  %v495 = vadd.f32 0.0, %v494
  %v496 = vpop.f32.mrf.mxu0
  %v497 = vadd.f32 0.0, %v496
  %498 = vdwg.mxu0
  %499 = vmatpush.bf16.msra.mxu0 %v393
  %500 = vmatpush.bf16.msra.mxu0 %v392
  %501 = vmatpush.bf16.msra.mxu0 %v391
  %502 = vmatpush.bf16.msra.mxu0 %v390
  %503 = vmatpush.bf16.msra.mxu0 %v389
  %504 = vmatpush.bf16.msra.mxu0 %v388
  %505 = vmatpush.bf16.msra.mxu0 %v387
  %506 = vmatpush.bf16.msra.mxu0 %v386
  %507 = vmatmul.bf16.gmra.mxu0 %v214
  %v508 = vpop.f32.mrf.mxu0
  %v509 = vadd.f32 %v420, %v508
  %v510 = vpop.f32.mrf.mxu0
  %v511 = vadd.f32 %v422, %v510
  %512 = vmatmul.bf16.gmra.mxu0 %v216
  %v513 = vpop.f32.mrf.mxu0
  %v514 = vadd.f32 %v425, %v513
  %v515 = vpop.f32.mrf.mxu0
  %v516 = vadd.f32 %v427, %v515
  %517 = vmatmul.bf16.gmra.mxu0 %v218
  %v518 = vpop.f32.mrf.mxu0
  %v519 = vadd.f32 %v430, %v518
  %v520 = vpop.f32.mrf.mxu0
  %v521 = vadd.f32 %v432, %v520
  %522 = vmatmul.bf16.gmra.mxu0 %v220
  %v523 = vpop.f32.mrf.mxu0
  %v524 = vadd.f32 %v435, %v523
  %v525 = vpop.f32.mrf.mxu0
  %v526 = vadd.f32 %v437, %v525
  %527 = vmatmul.bf16.gmra.mxu0 %v222
  %v528 = vpop.f32.mrf.mxu0
  %v529 = vadd.f32 %v440, %v528
  %v530 = vpop.f32.mrf.mxu0
  %v531 = vadd.f32 %v442, %v530
  %532 = vmatmul.bf16.gmra.mxu0 %v224
  %v533 = vpop.f32.mrf.mxu0
  %v534 = vadd.f32 %v445, %v533
  %v535 = vpop.f32.mrf.mxu0
  %v536 = vadd.f32 %v447, %v535
  %537 = vmatmul.bf16.gmra.mxu0 %v226
  %v538 = vpop.f32.mrf.mxu0
  %v539 = vadd.f32 %v450, %v538
  %v540 = vpop.f32.mrf.mxu0
  %v541 = vadd.f32 %v452, %v540
  %542 = vmatmul.bf16.gmra.mxu0 %v228
  %v543 = vpop.f32.mrf.mxu0
  %v544 = vadd.f32 %v455, %v543
  %v545 = vpop.f32.mrf.mxu0
  %v546 = vadd.f32 %v457, %v545
  %547 = vmatmul.bf16.gmra.mxu0 %v230
  %v548 = vpop.f32.mrf.mxu0
  %v549 = vadd.f32 %v460, %v548
  %v550 = vpop.f32.mrf.mxu0
  %v551 = vadd.f32 %v462, %v550
  %552 = vmatmul.bf16.gmra.mxu0 %v232
  %v553 = vpop.f32.mrf.mxu0
  %v554 = vadd.f32 %v465, %v553
  %v555 = vpop.f32.mrf.mxu0
  %v556 = vadd.f32 %v467, %v555
  %557 = vmatmul.bf16.gmra.mxu0 %v234
  %v558 = vpop.f32.mrf.mxu0
  %v559 = vadd.f32 %v470, %v558
  %v560 = vpop.f32.mrf.mxu0
  %v561 = vadd.f32 %v472, %v560
  %562 = vmatmul.bf16.gmra.mxu0 %v236
  %v563 = vpop.f32.mrf.mxu0
  %v564 = vadd.f32 %v475, %v563
  %v565 = vpop.f32.mrf.mxu0
  %v566 = vadd.f32 %v477, %v565
  %567 = vmatmul.bf16.gmra.mxu0 %v238
  %v568 = vpop.f32.mrf.mxu0
  %v569 = vadd.f32 %v480, %v568
  %v570 = vpop.f32.mrf.mxu0
  %v571 = vadd.f32 %v482, %v570
  %572 = vmatmul.bf16.gmra.mxu0 %v240
  %v573 = vpop.f32.mrf.mxu0
  %v574 = vadd.f32 %v485, %v573
  %v575 = vpop.f32.mrf.mxu0
  %v576 = vadd.f32 %v487, %v575
  %577 = vmatmul.bf16.gmra.mxu0 %v242
  %v578 = vpop.f32.mrf.mxu0
  %v579 = vadd.f32 %v490, %v578
  %v580 = vpop.f32.mrf.mxu0
  %v581 = vadd.f32 %v492, %v580
  %582 = vmatmul.bf16.gmra.mxu0 %v244
  %v583 = vpop.f32.mrf.mxu0
  %v584 = vadd.f32 %v495, %v583
  %v585 = vpop.f32.mrf.mxu0
  %v586 = vadd.f32 %v497, %v585
  %587 = vdwg.mxu0
  %v588 = vadd.f32 %v282, %v509
  %v589 = vadd.f32 %v283, %v511
  %v590 = vadd.f32 %v284, %v514
  %v591 = vadd.f32 %v285, %v516
  %v592 = vadd.f32 %v286, %v519
  %v593 = vadd.f32 %v287, %v521
  %v594 = vadd.f32 %v288, %v524
  %v595 = vadd.f32 %v289, %v526
  %v596 = vadd.f32 %v290, %v529
  %v597 = vadd.f32 %v291, %v531
  %v598 = vadd.f32 %v292, %v534
  %v599 = vadd.f32 %v293, %v536
  %v600 = vadd.f32 %v294, %v539
  %v601 = vadd.f32 %v295, %v541
  %v602 = vadd.f32 %v296, %v544
  %v603 = vadd.f32 %v297, %v546
  %v604 = vadd.f32 %v298, %v549
  %v605 = vadd.f32 %v299, %v551
  %v606 = vadd.f32 %v300, %v554
  %v607 = vadd.f32 %v301, %v556
  %v608 = vadd.f32 %v302, %v559
  %v609 = vadd.f32 %v303, %v561
  %v610 = vadd.f32 %v304, %v564
  %v611 = vadd.f32 %v305, %v566
  %v612 = vadd.f32 %v306, %v569
  %v613 = vadd.f32 %v307, %v571
  %v614 = vadd.f32 %v308, %v574
  %v615 = vadd.f32 %v309, %v576
  %v616 = vadd.f32 %v310, %v579
  %v617 = vadd.f32 %v311, %v581
  %v618 = vadd.f32 %v312, %v584
  %v619 = vadd.f32 %v313, %v586
  %620 = vst [vmem:[%s4] sm:$0xff] %v588
  %621 = vst [vmem:[%s4 + $0x8] sm:$0xff] %v589
  %622 = vst [vmem:[%s4 + $0x10] sm:$0xff] %v590
  %623 = vst [vmem:[%s4 + $0x18] sm:$0xff] %v591
  %624 = vst [vmem:[%s4 + $0x20] sm:$0xff] %v592
  %625 = vst [vmem:[%s4 + $0x28] sm:$0xff] %v593
  %626 = vst [vmem:[%s4 + $0x30] sm:$0xff] %v594
  %627 = vst [vmem:[%s4 + $0x38] sm:$0xff] %v595
  %628 = vst [vmem:[%s4 + $0x40] sm:$0xff] %v596
  %629 = vst [vmem:[%s4 + $0x48] sm:$0xff] %v597
  %630 = vst [vmem:[%s4 + $0x50] sm:$0xff] %v598
  %631 = vst [vmem:[%s4 + $0x58] sm:$0xff] %v599
  %632 = vst [vmem:[%s4 + $0x60] sm:$0xff] %v600
  %633 = vst [vmem:[%s4 + $0x68] sm:$0xff] %v601
  %634 = vst [vmem:[%s4 + $0x70] sm:$0xff] %v602
  %635 = vst [vmem:[%s4 + $0x78] sm:$0xff] %v603
  %636 = vst [vmem:[%s4 + $0x80] sm:$0xff] %v604
  %637 = vst [vmem:[%s4 + $0x88] sm:$0xff] %v605
  %638 = vst [vmem:[%s4 + $0x90] sm:$0xff] %v606
  %639 = vst [vmem:[%s4 + $0x98] sm:$0xff] %v607
  %640 = vst [vmem:[%s4 + $0xa0] sm:$0xff] %v608
  %641 = vst [vmem:[%s4 + $0xa8] sm:$0xff] %v609
  %642 = vst [vmem:[%s4 + $0xb0] sm:$0xff] %v610
  %643 = vst [vmem:[%s4 + $0xb8] sm:$0xff] %v611
  %644 = vst [vmem:[%s4 + $0xc0] sm:$0xff] %v612
  %645 = vst [vmem:[%s4 + $0xc8] sm:$0xff] %v613
  %646 = vst [vmem:[%s4 + $0xd0] sm:$0xff] %v614
  %647 = vst [vmem:[%s4 + $0xd8] sm:$0xff] %v615
  %648 = vst [vmem:[%s4 + $0xe0] sm:$0xff] %v616
  %649 = vst [vmem:[%s4 + $0xe8] sm:$0xff] %v617
  %650 = vst [vmem:[%s4 + $0xf0] sm:$0xff] %v618
  %651 = vst [vmem:[%s4 + $0xf8] sm:$0xff] %v619
  // Predicated region
  $region22: #{gcn_conv_pallas.1} parent=0 // pred_check
    %p652 = pneg %p17
  $region23: #{gcn_conv_pallas.1} parent=0 // pred_check_branch
    %654 = sbr.rel (%p652) target = $region25
  $region24: #{gcn_conv_pallas.1} parent=0 // pred_region
    %v655 = vld [vmem:[%s4] sm:$0xff]
    %v656 = vld [vmem:[%s4 + $0x8] sm:$0xff]
    %v657 = vld [vmem:[%s4 + $0x10] sm:$0xff]
    %v658 = vld [vmem:[%s4 + $0x18] sm:$0xff]
    %v659 = vld [vmem:[%s4 + $0x20] sm:$0xff]
    %v660 = vld [vmem:[%s4 + $0x28] sm:$0xff]
    %v661 = vld [vmem:[%s4 + $0x30] sm:$0xff]
    %v662 = vld [vmem:[%s4 + $0x38] sm:$0xff]
    %v663 = vld [vmem:[%s4 + $0x40] sm:$0xff]
    %v664 = vld [vmem:[%s4 + $0x48] sm:$0xff]
    %v665 = vld [vmem:[%s4 + $0x50] sm:$0xff]
    %v666 = vld [vmem:[%s4 + $0x58] sm:$0xff]
    %v667 = vld [vmem:[%s4 + $0x60] sm:$0xff]
    %v668 = vld [vmem:[%s4 + $0x68] sm:$0xff]
    %v669 = vld [vmem:[%s4 + $0x70] sm:$0xff]
    %v670 = vld [vmem:[%s4 + $0x78] sm:$0xff]
    %v671 = vld [vmem:[%s4 + $0x80] sm:$0xff]
    %v672 = vld [vmem:[%s4 + $0x88] sm:$0xff]
    %v673 = vld [vmem:[%s4 + $0x90] sm:$0xff]
    %v674 = vld [vmem:[%s4 + $0x98] sm:$0xff]
    %v675 = vld [vmem:[%s4 + $0xa0] sm:$0xff]
    %v676 = vld [vmem:[%s4 + $0xa8] sm:$0xff]
    %v677 = vld [vmem:[%s4 + $0xb0] sm:$0xff]
    %v678 = vld [vmem:[%s4 + $0xb8] sm:$0xff]
    %v679 = vld [vmem:[%s4 + $0xc0] sm:$0xff]
    %v680 = vld [vmem:[%s4 + $0xc8] sm:$0xff]
    %v681 = vld [vmem:[%s4 + $0xd0] sm:$0xff]
    %v682 = vld [vmem:[%s4 + $0xd8] sm:$0xff]
    %v683 = vld [vmem:[%s4 + $0xe0] sm:$0xff]
    %v684 = vld [vmem:[%s4 + $0xe8] sm:$0xff]
    %v685 = vld [vmem:[%s4 + $0xf0] sm:$0xff]
    %v686 = vld [vmem:[%s4 + $0xf8] sm:$0xff]
    %v687 = vld [vmem:[%s2] sm:$0xff]
    %v688 = vld [vmem:[%s2 + $0x8] sm:$0xff]
    %v689 = vld [vmem:[%s2 + $0x10] sm:$0xff]
    %v690 = vld [vmem:[%s2 + $0x18] sm:$0xff]
    %v691 = vld [vmem:[%s2 + $0x20] sm:$0xff]
    %v692 = vld [vmem:[%s2 + $0x28] sm:$0xff]
    %v693 = vld [vmem:[%s2 + $0x30] sm:$0xff]
    %v694 = vld [vmem:[%s2 + $0x38] sm:$0xff]
    %v695 = vld [vmem:[%s2 + $0x40] sm:$0xff]
    %v696 = vld [vmem:[%s2 + $0x48] sm:$0xff]
    %v697 = vld [vmem:[%s2 + $0x50] sm:$0xff]
    %v698 = vld [vmem:[%s2 + $0x58] sm:$0xff]
    %v699 = vld [vmem:[%s2 + $0x60] sm:$0xff]
    %v700 = vld [vmem:[%s2 + $0x68] sm:$0xff]
    %v701 = vld [vmem:[%s2 + $0x70] sm:$0xff]
    %v702 = vld [vmem:[%s2 + $0x78] sm:$0xff]
    %v703 = vld [vmem:[%s2 + $0x80] sm:$0xff]
    %v704 = vld [vmem:[%s2 + $0x88] sm:$0xff]
    %v705 = vld [vmem:[%s2 + $0x90] sm:$0xff]
    %v706 = vld [vmem:[%s2 + $0x98] sm:$0xff]
    %v707 = vld [vmem:[%s2 + $0xa0] sm:$0xff]
    %v708 = vld [vmem:[%s2 + $0xa8] sm:$0xff]
    %v709 = vld [vmem:[%s2 + $0xb0] sm:$0xff]
    %v710 = vld [vmem:[%s2 + $0xb8] sm:$0xff]
    %v711 = vld [vmem:[%s2 + $0xc0] sm:$0xff]
    %v712 = vld [vmem:[%s2 + $0xc8] sm:$0xff]
    %v713 = vld [vmem:[%s2 + $0xd0] sm:$0xff]
    %v714 = vld [vmem:[%s2 + $0xd8] sm:$0xff]
    %v715 = vld [vmem:[%s2 + $0xe0] sm:$0xff]
    %v716 = vld [vmem:[%s2 + $0xe8] sm:$0xff]
    %v717 = vld [vmem:[%s2 + $0xf0] sm:$0xff]
    %v718 = vld [vmem:[%s2 + $0xf8] sm:$0xff]
    %720 = vset.pattern.permute.xlu0 0
    %721 = vperm.xlu0 %720, %v687
    %v722 = vpop.permute.xlu0 %721
    %725 = vset.pattern.permute.xlu0 0
    %726 = vperm.xlu0 %725, %v688
    %v727 = vpop.permute.xlu0 %726
    %730 = vset.pattern.permute.xlu0 0
    %731 = vperm.xlu0 %730, %v689
    %v732 = vpop.permute.xlu0 %731
    %735 = vset.pattern.permute.xlu0 0
    %736 = vperm.xlu0 %735, %v690
    %v737 = vpop.permute.xlu0 %736
    %740 = vset.pattern.permute.xlu0 0
    %741 = vperm.xlu0 %740, %v691
    %v742 = vpop.permute.xlu0 %741
    %745 = vset.pattern.permute.xlu0 0
    %746 = vperm.xlu0 %745, %v692
    %v747 = vpop.permute.xlu0 %746
    %750 = vset.pattern.permute.xlu0 0
    %751 = vperm.xlu0 %750, %v693
    %v752 = vpop.permute.xlu0 %751
    %755 = vset.pattern.permute.xlu0 0
    %756 = vperm.xlu0 %755, %v694
    %v757 = vpop.permute.xlu0 %756
    %760 = vset.pattern.permute.xlu0 0
    %761 = vperm.xlu0 %760, %v695
    %v762 = vpop.permute.xlu0 %761
    %765 = vset.pattern.permute.xlu0 0
    %766 = vperm.xlu0 %765, %v696
    %v767 = vpop.permute.xlu0 %766
    %770 = vset.pattern.permute.xlu0 0
    %771 = vperm.xlu0 %770, %v697
    %v772 = vpop.permute.xlu0 %771
    %775 = vset.pattern.permute.xlu0 0
    %776 = vperm.xlu0 %775, %v698
    %v777 = vpop.permute.xlu0 %776
    %780 = vset.pattern.permute.xlu0 0
    %781 = vperm.xlu0 %780, %v699
    %v782 = vpop.permute.xlu0 %781
    %785 = vset.pattern.permute.xlu0 0
    %786 = vperm.xlu0 %785, %v700
    %v787 = vpop.permute.xlu0 %786
    %790 = vset.pattern.permute.xlu0 0
    %791 = vperm.xlu0 %790, %v701
    %v792 = vpop.permute.xlu0 %791
    %795 = vset.pattern.permute.xlu0 0
    %796 = vperm.xlu0 %795, %v702
    %v797 = vpop.permute.xlu0 %796
    %800 = vset.pattern.permute.xlu0 0
    %801 = vperm.xlu0 %800, %v703
    %v802 = vpop.permute.xlu0 %801
    %805 = vset.pattern.permute.xlu0 0
    %806 = vperm.xlu0 %805, %v704
    %v807 = vpop.permute.xlu0 %806
    %810 = vset.pattern.permute.xlu0 0
    %811 = vperm.xlu0 %810, %v705
    %v812 = vpop.permute.xlu0 %811
    %815 = vset.pattern.permute.xlu0 0
    %816 = vperm.xlu0 %815, %v706
    %v817 = vpop.permute.xlu0 %816
    %820 = vset.pattern.permute.xlu0 0
    %821 = vperm.xlu0 %820, %v707
    %v822 = vpop.permute.xlu0 %821
    %825 = vset.pattern.permute.xlu0 0
    %826 = vperm.xlu0 %825, %v708
    %v827 = vpop.permute.xlu0 %826
    %830 = vset.pattern.permute.xlu0 0
    %831 = vperm.xlu0 %830, %v709
    %v832 = vpop.permute.xlu0 %831
    %835 = vset.pattern.permute.xlu0 0
    %836 = vperm.xlu0 %835, %v710
    %v837 = vpop.permute.xlu0 %836
    %840 = vset.pattern.permute.xlu0 0
    %841 = vperm.xlu0 %840, %v711
    %v842 = vpop.permute.xlu0 %841
    %845 = vset.pattern.permute.xlu0 0
    %846 = vperm.xlu0 %845, %v712
    %v847 = vpop.permute.xlu0 %846
    %850 = vset.pattern.permute.xlu0 0
    %851 = vperm.xlu0 %850, %v713
    %v852 = vpop.permute.xlu0 %851
    %855 = vset.pattern.permute.xlu0 0
    %856 = vperm.xlu0 %855, %v714
    %v857 = vpop.permute.xlu0 %856
    %860 = vset.pattern.permute.xlu0 0
    %861 = vperm.xlu0 %860, %v715
    %v862 = vpop.permute.xlu0 %861
    %865 = vset.pattern.permute.xlu0 0
    %866 = vperm.xlu0 %865, %v716
    %v867 = vpop.permute.xlu0 %866
    %870 = vset.pattern.permute.xlu0 0
    %871 = vperm.xlu0 %870, %v717
    %v872 = vpop.permute.xlu0 %871
    %875 = vset.pattern.permute.xlu0 0
    %876 = vperm.xlu0 %875, %v718
    %v877 = vpop.permute.xlu0 %876
    %v879 = vmul.f32 %v655, %v722
    %v880 = vmul.f32 %v656, %v727
    %v881 = vmul.f32 %v657, %v732
    %v882 = vmul.f32 %v658, %v737
    %v883 = vmul.f32 %v659, %v742
    %v884 = vmul.f32 %v660, %v747
    %v885 = vmul.f32 %v661, %v752
    %v886 = vmul.f32 %v662, %v757
    %v887 = vmul.f32 %v663, %v762
    %v888 = vmul.f32 %v664, %v767
    %v889 = vmul.f32 %v665, %v772
    %v890 = vmul.f32 %v666, %v777
    %v891 = vmul.f32 %v667, %v782
    %v892 = vmul.f32 %v668, %v787
    %v893 = vmul.f32 %v669, %v792
    %v894 = vmul.f32 %v670, %v797
    %v895 = vmul.f32 %v671, %v802
    %v896 = vmul.f32 %v672, %v807
    %v897 = vmul.f32 %v673, %v812
    %v898 = vmul.f32 %v674, %v817
    %v899 = vmul.f32 %v675, %v822
    %v900 = vmul.f32 %v676, %v827
    %v901 = vmul.f32 %v677, %v832
    %v902 = vmul.f32 %v678, %v837
    %v903 = vmul.f32 %v679, %v842
    %v904 = vmul.f32 %v680, %v847
    %v905 = vmul.f32 %v681, %v852
    %v906 = vmul.f32 %v682, %v857
    %v907 = vmul.f32 %v683, %v862
    %v908 = vmul.f32 %v684, %v867
    %v909 = vmul.f32 %v685, %v872
    %v910 = vmul.f32 %v686, %v877
    %v911 = vld [vmem:[%s3] sm:$0x1]
    %v913 = vperm.slane %v911, 0
    %v915 = vadd.f32 %v879, %v913
    %v916 = vadd.f32 %v880, %v913
    %v917 = vadd.f32 %v881, %v913
    %v918 = vadd.f32 %v882, %v913
    %v919 = vadd.f32 %v883, %v913
    %v920 = vadd.f32 %v884, %v913
    %v921 = vadd.f32 %v885, %v913
    %v922 = vadd.f32 %v886, %v913
    %v923 = vadd.f32 %v887, %v913
    %v924 = vadd.f32 %v888, %v913
    %v925 = vadd.f32 %v889, %v913
    %v926 = vadd.f32 %v890, %v913
    %v927 = vadd.f32 %v891, %v913
    %v928 = vadd.f32 %v892, %v913
    %v929 = vadd.f32 %v893, %v913
    %v930 = vadd.f32 %v894, %v913
    %v931 = vadd.f32 %v895, %v913
    %v932 = vadd.f32 %v896, %v913
    %v933 = vadd.f32 %v897, %v913
    %v934 = vadd.f32 %v898, %v913
    %v935 = vadd.f32 %v899, %v913
    %v936 = vadd.f32 %v900, %v913
    %v937 = vadd.f32 %v901, %v913
    %v938 = vadd.f32 %v902, %v913
    %v939 = vadd.f32 %v903, %v913
    %v940 = vadd.f32 %v904, %v913
    %v941 = vadd.f32 %v905, %v913
    %v942 = vadd.f32 %v906, %v913
    %v943 = vadd.f32 %v907, %v913
    %v944 = vadd.f32 %v908, %v913
    %v945 = vadd.f32 %v909, %v913
    %v946 = vadd.f32 %v910, %v913
    %947 = vst [vmem:[%s4] sm:$0xff] %v915
    %948 = vst [vmem:[%s4 + $0x8] sm:$0xff] %v916
    %949 = vst [vmem:[%s4 + $0x10] sm:$0xff] %v917
    %950 = vst [vmem:[%s4 + $0x18] sm:$0xff] %v918
    %951 = vst [vmem:[%s4 + $0x20] sm:$0xff] %v919
    %952 = vst [vmem:[%s4 + $0x28] sm:$0xff] %v920
    %953 = vst [vmem:[%s4 + $0x30] sm:$0xff] %v921
    %954 = vst [vmem:[%s4 + $0x38] sm:$0xff] %v922
    %955 = vst [vmem:[%s4 + $0x40] sm:$0xff] %v923
    %956 = vst [vmem:[%s4 + $0x48] sm:$0xff] %v924
    %957 = vst [vmem:[%s4 + $0x50] sm:$0xff] %v925
    %958 = vst [vmem:[%s4 + $0x58] sm:$0xff] %v926
    %959 = vst [vmem:[%s4 + $0x60] sm:$0xff] %v927
    %960 = vst [vmem:[%s4 + $0x68] sm:$0xff] %v928
    %961 = vst [vmem:[%s4 + $0x70] sm:$0xff] %v929
    %962 = vst [vmem:[%s4 + $0x78] sm:$0xff] %v930
    %963 = vst [vmem:[%s4 + $0x80] sm:$0xff] %v931
    %964 = vst [vmem:[%s4 + $0x88] sm:$0xff] %v932
    %965 = vst [vmem:[%s4 + $0x90] sm:$0xff] %v933
    %966 = vst [vmem:[%s4 + $0x98] sm:$0xff] %v934
    %967 = vst [vmem:[%s4 + $0xa0] sm:$0xff] %v935
    %968 = vst [vmem:[%s4 + $0xa8] sm:$0xff] %v936
    %969 = vst [vmem:[%s4 + $0xb0] sm:$0xff] %v937
    %970 = vst [vmem:[%s4 + $0xb8] sm:$0xff] %v938
    %971 = vst [vmem:[%s4 + $0xc0] sm:$0xff] %v939
    %972 = vst [vmem:[%s4 + $0xc8] sm:$0xff] %v940
    %973 = vst [vmem:[%s4 + $0xd0] sm:$0xff] %v941
    %974 = vst [vmem:[%s4 + $0xd8] sm:$0xff] %v942
    %975 = vst [vmem:[%s4 + $0xe0] sm:$0xff] %v943
    %976 = vst [vmem:[%s4 + $0xe8] sm:$0xff] %v944
    %977 = vst [vmem:[%s4 + $0xf0] sm:$0xff] %v945
    %978 = vst [vmem:[%s4 + $0xf8] sm:$0xff] %v946
  $region25: #{gcn_conv_pallas.1} parent=0 // pred_fallthru
    _
  // Predicated region
  $region26: #{gcn_conv_pallas.1} parent=0 // pred_check
    _
  $region27: #{gcn_conv_pallas.1} parent=0 // pred_check_branch
    %980 = sbr.rel (0) target = $region29
  $region28: #{gcn_conv_pallas.1} parent=0 // pred_region
    _
  $region29: #{gcn_conv_pallas.1} parent=0 // pred_fallthru
    _
  // Predicated region
  $region30: #{gcn_conv_pallas.1} parent=0 // pred_check
    _
  $region31: #{gcn_conv_pallas.1} parent=0 // pred_check_branch
    %982 = sbr.rel (0) target = $region33
  $region32: #{gcn_conv_pallas.1} parent=0 // pred_region
    _
  $region33: #{gcn_conv_pallas.1} parent=0 // pred_fallthru
    _

</llo_original>
